<compile_context>
chip_gen: v6e
topology: v6e:2x2x1
jax: 0.10.0
libtpu: 0.0.40
codegen_flags: <defaults>
</compile_context>

<pallas_src>
import jax
import jax.numpy as jnp
from jax import lax
from jax.experimental import pallas as pl
from jax.experimental.pallas import tpu as pltpu

BN_EPS = 1e-5


# ---------------------------------------------------------------------------
# Sizing helpers (generation-aware)
# ---------------------------------------------------------------------------
def _round_up(x, m):
    return (x + m - 1) // m * m


def _vmem_limit_bytes():
    """~3/4 of physical VMEM; conservative 48 MiB fallback (v7x per-core)."""
    try:
        phys = int(pltpu.get_tpu_info().vmem_capacity_bytes)
    except Exception:
        phys = 64 * 1024 * 1024
    return max(32 * 1024 * 1024, (phys * 3) // 4)


def _pick_hw_tile(hw, bn, c, itemsize, budget_bytes):
    """Largest multiple-of-128 lane tile with bn*c*thw*itemsize <= budget."""
    max_t = (budget_bytes // max(bn * c * itemsize, 1)) // 128 * 128
    return max(128, min(_round_up(hw, 128), max_t))


def _pick_batch_block(n, c, itemsize, budget_bytes):
    """Largest divisor of n (<= 8) whose minimal (bn, c, 128) tile fits."""
    for d in range(min(n, 8), 0, -1):
        if n % d == 0 and d * c * 128 * itemsize <= budget_bytes:
            return d
    return 1


# ---------------------------------------------------------------------------
# Kernels
# ---------------------------------------------------------------------------
def _make_stats_kernel(bn, c, thw, hw_total):
    """Accumulate per-channel sum s and Gram matrix G = x1 @ x1^T per n-block.

    x1_ref: (bn, C, thw)   s_ref: (1, C, 1) f32   g_ref: (1, C, C) f32
    (resident accumulators along the hw grid axis).
    """
    ragged = (hw_total % thw) != 0

    def kernel(x1_ref, s_ref, g_ref):
        j = pl.program_id(1)

        @pl.when(j == 0)
        def _():
            s_ref[...] = jnp.zeros_like(s_ref)
            g_ref[...] = jnp.zeros_like(g_ref)

        if ragged:
            lane = lax.broadcasted_iota(jnp.int32, (c, thw), 1)
            rem = hw_total - j * thw  # valid lanes in this tile

        s_acc = s_ref[0]
        g_acc = g_ref[0]
        for b in range(bn):
            xb = x1_ref[b]  # (C, thw), input dtype
            if ragged:
                xb = jnp.where(lane < rem, xb, jnp.zeros_like(xb))
            s_acc = s_acc + jnp.sum(xb.astype(jnp.float32), axis=1,
                                    keepdims=True)
            # Gram update on the MXU: contraction over the big thw dim.
            g_acc = g_acc + lax.dot_general(
                xb, xb, (((1,), (1,)), ((), ())),
                preferred_element_type=jnp.float32)
        s_ref[0] = s_acc
        g_ref[0] = g_acc

    return kernel


def _make_apply_kernel(bn, bf16_epilogue):
    """out = relu(conv(x1) * scale + shift + x2) on one (bn, C, thw) tile."""

    def kernel(x1_ref, x2_ref, w_ref, scale_ref, shift_ref, o_ref):
        w = w_ref[...]
        scale = scale_ref[...]  # (C, 1) f32
        shift = shift_ref[...]
        for b in range(bn):
            conv = jnp.dot(w, x1_ref[b], preferred_element_type=jnp.float32)
            y = conv * scale + shift
            if bf16_epilogue:
                # bf16 VALU epilogue (v6e/v7x): add residual + ReLU in bf16.
                y = y.astype(o_ref.dtype) + x2_ref[b]
                o_ref[b] = jnp.maximum(y, 0)
            else:
                y = y + x2_ref[b].astype(jnp.float32)
                o_ref[b] = jnp.maximum(y, 0.0).astype(o_ref.dtype)

    return kernel


# ---------------------------------------------------------------------------
# Wrapper
# ---------------------------------------------------------------------------
def fusion_forward(x1_nchw, x2_nchw, conv_w, conv_b, bn_gamma, bn_beta):
    """x1, x2: (N, C, H, W).  conv_w: (C, C, 1, 1).  Returns (N, C, H, W)."""
    del conv_b  # cancels exactly under training-mode batch-mean subtraction
    N, C, H, W = x1_nchw.shape
    HW = H * W
    dtype = x1_nchw.dtype
    itemsize = dtype.itemsize

    vmem_limit = _vmem_limit_bytes()
    # pass 2 pipelines 3 streams x 2 buffers (+ f32 temps) -> ~limit/10 / tile
    apply_budget = vmem_limit // 10
    # pass 1 streams only x1 (+ tiny accumulators)         -> ~limit/6  / tile
    stats_budget = vmem_limit // 6

    bn_blk = _pick_batch_block(N, C, itemsize, apply_budget)
    n_n = N // bn_blk
    thw_s = _pick_hw_tile(HW, bn_blk, C, itemsize, stats_budget)
    thw_a = _pick_hw_tile(HW, bn_blk, C, itemsize, apply_budget)
    n_hw_s = pl.cdiv(HW, thw_s)
    n_hw_a = pl.cdiv(HW, thw_a)

    # Free reshapes — no padding, no copies.
    x1 = x1_nchw.reshape(N, C, HW)
    x2 = x2_nchw.reshape(N, C, HW)
    # PyTorch 1x1 conv weight (Cout, Cin, 1, 1) -> (Cout, Cin): conv = W @ X.
    w_mat = conv_w.reshape(C, C).astype(dtype)

    # ---- pass 1: per batch-block partial sum / Gram matrix -----------------
    s_part, g_part = pl.pallas_call(
        _make_stats_kernel(bn_blk, C, thw_s, HW),
        out_shape=(
            jax.ShapeDtypeStruct((n_n, C, 1), jnp.float32),
            jax.ShapeDtypeStruct((n_n, C, C), jnp.float32),
        ),
        grid=(n_n, n_hw_s),
        in_specs=[pl.BlockSpec((bn_blk, C, thw_s), lambda n, j: (n, 0, j))],
        out_specs=(
            pl.BlockSpec((1, C, 1), lambda n, j: (n, 0, 0)),
            pl.BlockSpec((1, C, C), lambda n, j: (n, 0, 0)),
        ),
        compiler_params=pltpu.CompilerParams(
            dimension_semantics=("parallel", "arbitrary"),
            vmem_limit_bytes=vmem_limit,
        ),
    )(x1)

    # ---- tiny XLA glue: fold BN into a per-channel scale/shift -------------
    hi = lax.Precision.HIGHEST
    w32 = conv_w.reshape(C, C).astype(jnp.float32)
    s = jnp.sum(s_part, axis=0)                        # (C, 1)
    g = jnp.sum(g_part, axis=0)                        # (C, C)
    count = jnp.float32(N * HW)
    mean = jnp.matmul(w32, s, precision=hi) / count    # (C, 1)
    wg = jnp.matmul(w32, g, precision=hi)              # (C, C)
    ex2 = jnp.sum(wg * w32, axis=1, keepdims=True) / count  # diag(W G W^T)/cnt
    var = jnp.maximum(ex2 - mean * mean, 0.0)          # clamp cancellation
    inv_std = lax.rsqrt(var + BN_EPS)
    scale = bn_gamma.reshape(C, 1).astype(jnp.float32) * inv_std
    shift = bn_beta.reshape(C, 1).astype(jnp.float32) - mean * scale

    # ---- pass 2: conv -> affine -> +x2 -> ReLU ------------------------------
    bf16_epi = (dtype == jnp.bfloat16)
    out = pl.pallas_call(
        _make_apply_kernel(bn_blk, bf16_epi),
        out_shape=jax.ShapeDtypeStruct((N, C, HW), dtype),
        grid=(n_n, n_hw_a),
        in_specs=[
            pl.BlockSpec((bn_blk, C, thw_a), lambda n, j: (n, 0, j)),
            pl.BlockSpec((bn_blk, C, thw_a), lambda n, j: (n, 0, j)),
            pl.BlockSpec((C, C), lambda n, j: (0, 0)),
            pl.BlockSpec((C, 1), lambda n, j: (0, 0)),
            pl.BlockSpec((C, 1), lambda n, j: (0, 0)),
        ],
        out_specs=pl.BlockSpec((bn_blk, C, thw_a), lambda n, j: (n, 0, j)),
        compiler_params=pltpu.CompilerParams(
            dimension_semantics=("parallel", "parallel"),
            vmem_limit_bytes=vmem_limit,
        ),
    )(x1, x2, w_mat, scale, shift)

    return out.reshape(N, C, H, W)


# ---------------------------------------------------------------------------
# Pure-JAX reference (matches PyTorch training-mode forward, bias included)
# ---------------------------------------------------------------------------
def fusion_reference(x1, x2, conv_w, conv_b, bn_gamma, bn_beta):
    N, C, H, W = x1.shape
    w = conv_w.reshape(C, C)
    conv = jnp.einsum("oc,nchw->nohw", w, x1,
                      precision=lax.Precision.HIGHEST)
    conv = conv + conv_b.reshape(1, C, 1, 1)
    mean = conv.mean(axis=(0, 2, 3), keepdims=True)
    var = ((conv - mean) ** 2).mean(axis=(0, 2, 3), keepdims=True)
    y = (conv - mean) * lax.rsqrt(var + BN_EPS)
    y = y * bn_gamma.reshape(1, C, 1, 1) + bn_beta.reshape(1, C, 1, 1)
    return jnp.maximum(y + x2, 0.0)


if __name__ == "__main__":
    # Small shapes: batch=2, channels=4, spatial=16x16
    N, C, H, W = 2, 4, 16, 16
    key = jax.random.PRNGKey(0)
    k1, k2, k3, k4 = jax.random.split(key, 4)

    x1 = jax.random.normal(k1, (N, C, H, W), dtype=jnp.float32)
    x2 = jax.random.normal(k2, (N, C, H, W), dtype=jnp.float32)

    conv_w = jax.random.normal(k3, (C, C, 1, 1), dtype=jnp.float32) * 0.1
    conv_b = jax.random.normal(k4, (C,), dtype=jnp.float32) * 0.1
    bn_gamma = jnp.ones((C,), dtype=jnp.float32)   # PyTorch default init
    bn_beta = jnp.zeros((C,), dtype=jnp.float32)

    out = fusion_forward(x1, x2, conv_w, conv_b, bn_gamma, bn_beta)
    jax.block_until_ready(out)

    ref = fusion_reference(x1, x2, conv_w, conv_b, bn_gamma, bn_beta)
    assert out.shape == (N, C, H, W)
    assert jnp.allclose(out, ref, atol=1e-3, rtol=1e-3), "mismatch vs reference"

    print("KERNEL_OK")
</pallas_src>

<mosaic_0001>
module attributes {stable_mosaic.version = 11 : i64} {
  func.func @kernel(%arg0: i32, %arg1: i32, %arg2: memref<2x4x256xf32, #tpu.memory_space<vmem>>, %arg3: memref<1x4x1xf32, #tpu.memory_space<vmem>>, %arg4: memref<1x4x4xf32, #tpu.memory_space<vmem>>) attributes {dimension_semantics = [#tpu.dimension_semantics<parallel>, #tpu.dimension_semantics<arbitrary>], iteration_bounds = array<i64: 1, 1>, scalar_prefetch = 0 : i64, scratch_operands = 0 : i64, tpu.core_type = #tpu.core_type<tc>, window_params = [{transform_indices = @transform_0, window_bounds = array<i64: 2, 4, 256>}, {transform_indices = @transform_1, window_bounds = array<i64: 1, 4, 1>}, {transform_indices = @transform_2, window_bounds = array<i64: 1, 4, 4>}]} {
    %c0_i32 = arith.constant 0 : i32
    %0 = arith.cmpi eq, %arg1, %c0_i32 : i32
    %1 = arith.extui %0 : i1 to i32
    %c0_i32_0 = arith.constant 0 : i32
    %2 = arith.cmpi ne, %1, %c0_i32_0 : i32
    scf.if %2 {
      %cst_20 = arith.constant 0.000000e+00 : f32
      %27 = vector.broadcast %cst_20 : f32 to vector<1x4x1xf32>
      %c0_21 = arith.constant 0 : index
      %c0_22 = arith.constant 0 : index
      %c0_23 = arith.constant 0 : index
      %28 = vector.load %arg3[%c0_21, %c0_22, %c0_23] : memref<1x4x1xf32, #tpu.memory_space<vmem>>, vector<1x4x1xf32>
      tpu.vector_store %arg3[%c0_21, %c0_22, %c0_23], %27 {strides = array<i32>} : memref<1x4x1xf32, #tpu.memory_space<vmem>>, vector<1x4x1xf32>,
      %cst_24 = arith.constant 0.000000e+00 : f32
      %29 = vector.broadcast %cst_24 : f32 to vector<1x4x4xf32>
      %c0_25 = arith.constant 0 : index
      %c0_26 = arith.constant 0 : index
      %c0_27 = arith.constant 0 : index
      %30 = vector.load %arg4[%c0_25, %c0_26, %c0_27] : memref<1x4x4xf32, #tpu.memory_space<vmem>>, vector<1x4x4xf32>
      tpu.vector_store %arg4[%c0_25, %c0_26, %c0_27], %29 {strides = array<i32>} : memref<1x4x4xf32, #tpu.memory_space<vmem>>, vector<1x4x4xf32>,
    } else {
    }
    %c0 = arith.constant 0 : index
    %c0_1 = arith.constant 0 : index
    %c0_2 = arith.constant 0 : index
    %3 = vector.load %arg3[%c0, %c0_1, %c0_2] : memref<1x4x1xf32, #tpu.memory_space<vmem>>, vector<1x4x1xf32>
    %4 = vector.shape_cast %3 : vector<1x4x1xf32> to vector<4x1xf32>
    %c0_3 = arith.constant 0 : index
    %c0_4 = arith.constant 0 : index
    %c0_5 = arith.constant 0 : index
    %5 = vector.load %arg4[%c0_3, %c0_4, %c0_5] : memref<1x4x4xf32, #tpu.memory_space<vmem>>, vector<1x4x4xf32>
    %6 = vector.shape_cast %5 : vector<1x4x4xf32> to vector<4x4xf32>
    %c0_6 = arith.constant 0 : index
    %c0_7 = arith.constant 0 : index
    %c0_8 = arith.constant 0 : index
    %7 = vector.load %arg2[%c0_6, %c0_7, %c0_8] : memref<2x4x256xf32, #tpu.memory_space<vmem>>, vector<1x4x256xf32>
    %8 = vector.shape_cast %7 : vector<1x4x256xf32> to vector<4x256xf32>
    %cst = arith.constant dense<0.000000e+00> : vector<4xf32>
    %9 = vector.multi_reduction <add>, %8, %cst [1] : vector<4x256xf32> to vector<4xf32>
    %10 = vector.shape_cast %9 : vector<4xf32> to vector<4x1xf32>
    %11 = arith.addf %4, %10 : vector<4x1xf32>
    %cst_9 = arith.constant dense<0.000000e+00> : vector<4x4xf32>
    %12 = tpu.matmul %8, %8, %cst_9 {dimension_numbers = #tpu.dot_dimension_numbers<[1], [1], [0], [0], [0, 0, 1, 0], [], []>} : vector<4x256xf32>, vector<4x256xf32>, vector<4x4xf32> -> vector<4x4xf32>
    %13 = arith.addf %6, %12 : vector<4x4xf32>
    %c1 = arith.constant 1 : index
    %c0_10 = arith.constant 0 : index
    %c0_11 = arith.constant 0 : index
    %14 = vector.load %arg2[%c1, %c0_10, %c0_11] : memref<2x4x256xf32, #tpu.memory_space<vmem>>, vector<1x4x256xf32>
    %15 = vector.shape_cast %14 : vector<1x4x256xf32> to vector<4x256xf32>
    %cst_12 = arith.constant dense<0.000000e+00> : vector<4xf32>
    %16 = vector.multi_reduction <add>, %15, %cst_12 [1] : vector<4x256xf32> to vector<4xf32>
    %17 = vector.shape_cast %16 : vector<4xf32> to vector<4x1xf32>
    %18 = arith.addf %11, %17 : vector<4x1xf32>
    %cst_13 = arith.constant dense<0.000000e+00> : vector<4x4xf32>
    %19 = tpu.matmul %15, %15, %cst_13 {dimension_numbers = #tpu.dot_dimension_numbers<[1], [1], [0], [0], [0, 0, 1, 0], [], []>} : vector<4x256xf32>, vector<4x256xf32>, vector<4x4xf32> -> vector<4x4xf32>
    %20 = arith.addf %13, %19 : vector<4x4xf32>
    %c0_14 = arith.constant 0 : index
    %c0_15 = arith.constant 0 : index
    %c0_16 = arith.constant 0 : index
    %21 = vector.load %arg3[%c0_14, %c0_15, %c0_16] : memref<1x4x1xf32, #tpu.memory_space<vmem>>, vector<1x4x1xf32>
    %22 = vector.shape_cast %21 : vector<1x4x1xf32> to vector<4x1xf32>
    %23 = vector.shape_cast %18 : vector<4x1xf32> to vector<1x4x1xf32>
    tpu.vector_store %arg3[%c0_14, %c0_15, %c0_16], %23 {strides = array<i32>} : memref<1x4x1xf32, #tpu.memory_space<vmem>>, vector<1x4x1xf32>,
    %c0_17 = arith.constant 0 : index
    %c0_18 = arith.constant 0 : index
    %c0_19 = arith.constant 0 : index
    %24 = vector.load %arg4[%c0_17, %c0_18, %c0_19] : memref<1x4x4xf32, #tpu.memory_space<vmem>>, vector<1x4x4xf32>
    %25 = vector.shape_cast %24 : vector<1x4x4xf32> to vector<4x4xf32>
    %26 = vector.shape_cast %20 : vector<4x4xf32> to vector<1x4x4xf32>
    tpu.vector_store %arg4[%c0_17, %c0_18, %c0_19], %26 {strides = array<i32>} : memref<1x4x4xf32, #tpu.memory_space<vmem>>, vector<1x4x4xf32>,
    return
  }
  func.func @transform_0(%arg0: i32, %arg1: i32) -> (i32, i32, i32) {
    %c0_i32 = arith.constant 0 : i32
    %c0_i32_0 = arith.constant 0 : i32
    return %arg0, %c0_i32, %arg1 : i32, i32, i32
  }
  func.func @transform_1(%arg0: i32, %arg1: i32) -> (i32, i32, i32) {
    %c0_i32 = arith.constant 0 : i32
    %c0_i32_0 = arith.constant 0 : i32
    %c0_i32_1 = arith.constant 0 : i32
    return %arg0, %c0_i32, %c0_i32_0 : i32, i32, i32
  }
  func.func @transform_2(%arg0: i32, %arg1: i32) -> (i32, i32, i32) {
    %c0_i32 = arith.constant 0 : i32
    %c0_i32_0 = arith.constant 0 : i32
    %c0_i32_1 = arith.constant 0 : i32
    return %arg0, %c0_i32, %c0_i32_0 : i32, i32, i32
  }
}

</mosaic_0001>

<llo_original>
// kernel: tpu_custom_call.1
$region0: #{tpu_custom_call.1}
  #allocation0 [shape = 'u32[]', space=smem, size = 0x4, offset = 0x4, fixed_abs, tag = 'smem constant byte address 0x4 - core index']
  #allocation1 [shape = 'u32[144,128]{1,0:T(1,128)}', space=vmem, size = 0x12000, scoped, tag = 'internal scratch']
  %s0 = inlined_call_operand.hbm [shape: f32[2,4,256], index: 0, kind: input, shape index: {}]
  %s1 = inlined_call_operand.vmem [shape: f32[1,4,1], index: 1, kind: output, shape index: {0}]
  %s2 = inlined_call_operand.hbm [shape: f32[1,4,4], index: 2, kind: output, shape index: {1}]
  %3 = xla_tuple %s1, %s2
  %s4 = sld [smem:[#allocation0]]
  $region30: #{tpu_custom_call.1} parent=0
    _
  %s6 = ssub.s32 1, %s4
  %s7 = scalar_select 0, %s6, %s4
  $region1: #{tpu_custom_call.1} parent=0
    #allocation2 [shape = 'u8[8192]{0}', space=vmem, size = 0x2000, scoped, tag = 'input window, operand 0, single buffered']
    #allocation3 [shape = 's32[1]{0}', space=sflag, size = 0x4, scoped, tag = 'scoped memory for tpu_custom_call.1']
    #allocation4 [shape = 's32[1]{0}', space=sflag, size = 0x4, scoped, tag = 'scoped memory for tpu_custom_call.1']
    #allocation5 [shape = 'u8[2048]{0}', space=vmem, size = 0x800, scoped, tag = 'output window, operand 1, single buffered']
    %8 = vsyncpa [#allocation3], 0
    %9 = vsyncpa [#allocation4], 0
    // Predicated region
    $region2: #{tpu_custom_call.1} parent=1 // pred_check
      _
    $region3: #{tpu_custom_call.1} parent=1 // pred_check_branch
      %11 = sbr.rel (0) target = $region5
    $region4: #{tpu_custom_call.1} parent=1 // pred_region
      %s13 = ssub.s32 256, 256
      %14 = vsyncadd [#allocation3], %s13
      %s15 = sshll.u32 [#allocation2], 4
      %s16 = int_to_ptr.vmem [resolvable:$true] %s15
      %21 = dma.hbm_to_vmem [thread:$0]  %s0, 256, %s16, [#allocation3], 128, 128, 8
    $region5: #{tpu_custom_call.1} parent=1 // pred_fallthru
      _
    // Predicated region
    $region6: #{tpu_custom_call.1} parent=1 // pred_check
      _
    $region7: #{tpu_custom_call.1} parent=1 // pred_check_branch
      %23 = sbr.rel (0) target = $region9
    $region8: #{tpu_custom_call.1} parent=1 // pred_region
      %24 = dma.done [#allocation3], 256
    $region9: #{tpu_custom_call.1} parent=1 // pred_fallthru
      _
    %p25 = scmp.eq.s32.totalorder 0, 0
    // Predicated region
    $region10: #{tpu_custom_call.1} parent=1 // pred_check
      %p26 = pneg %p25
    $region11: #{tpu_custom_call.1} parent=1 // pred_check_branch
      %28 = sbr.rel (%p26) target = $region13
    $region12: #{tpu_custom_call.1} parent=1 // pred_region
      %vm29 = vcmask 3072
      %30 = vst.msk [vmem:[%s1] sm:$0xf] %vm29, 0.0
      %vm31 = vcmask 27648
      %32 = vst.msk [vmem:[#allocation5] sm:$0xf] %vm31, 0.0
    $region13: #{tpu_custom_call.1} parent=1 // pred_fallthru
      _
    %v33 = vld [vmem:[%s1] sm:$0xf]
    %v34 = vld [vmem:[#allocation5] sm:$0xf]
    %v35 = vld [vmem:[#allocation2] sm:$0xff]
    %v37 = vcombine.high %v35, %v35
    %vm39 = vcmask 1043456
    %v40 = vsel %vm39, %v35, 0.0
    %v41 = vsel %vm39, %v37, 0.0
    %v42 = vadd.f32 %v40, %v41
    %43 = vadd.xlane.f32.xlu0 %v42
    %v44 = vpop.xlane.xlu0 %43
    %v45 = vadd.f32 %v33, %v44
    %46 = vmatprep.subr.mxu0 0.0
    %47 = vmatpush1.xpose.msra.mxu0 0.0
    %48 = vmatprep.subr.mxu0 0.0
    %49 = vmatpush1.xpose.msra.mxu0 0.0
    %50 = vmatprep.subr.mxu0 0.0
    %51 = vmatpush1.xpose.msra.mxu0 0.0
    %52 = vmatprep.subr.mxu0 0.0
    %53 = vmatpush1.xpose.msra.mxu0 0.0
    %54 = vmatprep.subr.mxu0 0.0
    %55 = vmatpush1.xpose.msra.mxu0 0.0
    %56 = vmatprep.subr.mxu0 0.0
    %57 = vmatpush1.xpose.msra.mxu0 0.0
    %58 = vmatprep.subr.mxu0 0.0
    %59 = vmatpush1.xpose.msra.mxu0 0.0
    %60 = vmatprep.subr.mxu0 0.0
    %61 = vmatpush1.xpose.msra.mxu0 0.0
    %62 = vmatprep.subr.mxu0 0.0
    %63 = vmatpush1.xpose.msra.mxu0 0.0
    %64 = vmatprep.subr.mxu0 0.0
    %65 = vmatpush1.xpose.msra.mxu0 0.0
    %66 = vmatprep.subr.mxu0 0.0
    %67 = vmatpush1.xpose.msra.mxu0 0.0
    %68 = vmatprep.subr.mxu0 0.0
    %69 = vmatpush1.xpose.msra.mxu0 0.0
    %70 = vmatprep.subr.mxu0 0.0
    %71 = vmatpush1.xpose.msra.mxu0 0.0
    %72 = vmatprep.subr.mxu0 0.0
    %73 = vmatpush1.xpose.msra.mxu0 0.0
    %74 = vmatprep.subr.mxu0 0.0
    %75 = vmatpush1.xpose.msra.mxu0 0.0
    %76 = vmatprep.subr.mxu0 %v37
    %77 = vmatpush1.xpose.msra.mxu0 %v35
    %78 = vmatprep.subr.mxu0 0.0
    %79 = vmatpush2.xpose.msra.mxu0 0.0
    %80 = vmatprep.subr.mxu0 0.0
    %81 = vmatpush2.xpose.msra.mxu0 0.0
    %82 = vmatprep.subr.mxu0 0.0
    %83 = vmatpush2.xpose.msra.mxu0 0.0
    %84 = vmatprep.subr.mxu0 0.0
    %85 = vmatpush2.xpose.msra.mxu0 0.0
    %86 = vmatprep.subr.mxu0 0.0
    %87 = vmatpush2.xpose.msra.mxu0 0.0
    %88 = vmatprep.subr.mxu0 0.0
    %89 = vmatpush2.xpose.msra.mxu0 0.0
    %90 = vmatprep.subr.mxu0 0.0
    %91 = vmatpush2.xpose.msra.mxu0 0.0
    %92 = vmatprep.subr.mxu0 0.0
    %93 = vmatpush2.xpose.msra.mxu0 0.0
    %94 = vmatprep.subr.mxu0 0.0
    %95 = vmatpush2.xpose.msra.mxu0 0.0
    %96 = vmatprep.subr.mxu0 0.0
    %97 = vmatpush2.xpose.msra.mxu0 0.0
    %98 = vmatprep.subr.mxu0 0.0
    %99 = vmatpush2.xpose.msra.mxu0 0.0
    %100 = vmatprep.subr.mxu0 0.0
    %101 = vmatpush2.xpose.msra.mxu0 0.0
    %102 = vmatprep.subr.mxu0 0.0
    %103 = vmatpush2.xpose.msra.mxu0 0.0
    %104 = vmatprep.subr.mxu0 0.0
    %105 = vmatpush2.xpose.msra.mxu0 0.0
    %106 = vmatprep.subr.mxu0 0.0
    %107 = vmatpush2.xpose.msra.mxu0 0.0
    %108 = vmatprep.subr.mxu0 0.0
    %109 = vmatpush2.xpose.msra.mxu0 0.0
    %110 = vmatprep.mubr.f32.mxu0 %v37
    %111 = vmatmul.mubr.f32.gmra.mxu0 %v35
    %v112 = vpop.f32.mrf.mxu0
    %v113 = vadd.f32 0.0, %v112
    %v114 = vpop.f32.mrf.mxu0
    %115 = vdwg.mxu0
    %v116 = vadd.f32 %v34, %v113
    %s117 = scalar_lea.vmem [#allocation2], 8
    %v118 = vld [vmem:[%s117] sm:$0xff]
    %v120 = vcombine.high %v118, %v118
    %v122 = vsel %vm39, %v118, 0.0
    %v123 = vsel %vm39, %v120, 0.0
    %v124 = vadd.f32 %v122, %v123
    %125 = vadd.xlane.f32.xlu0 %v124
    %v126 = vpop.xlane.xlu0 %125
    %v127 = vadd.f32 %v45, %v126
    %128 = vmatprep.subr.mxu0 0.0
    %129 = vmatpush1.xpose.msra.mxu0 0.0
    %130 = vmatprep.subr.mxu0 0.0
    %131 = vmatpush1.xpose.msra.mxu0 0.0
    %132 = vmatprep.subr.mxu0 0.0
    %133 = vmatpush1.xpose.msra.mxu0 0.0
    %134 = vmatprep.subr.mxu0 0.0
    %135 = vmatpush1.xpose.msra.mxu0 0.0
    %136 = vmatprep.subr.mxu0 0.0
    %137 = vmatpush1.xpose.msra.mxu0 0.0
    %138 = vmatprep.subr.mxu0 0.0
    %139 = vmatpush1.xpose.msra.mxu0 0.0
    %140 = vmatprep.subr.mxu0 0.0
    %141 = vmatpush1.xpose.msra.mxu0 0.0
    %142 = vmatprep.subr.mxu0 0.0
    %143 = vmatpush1.xpose.msra.mxu0 0.0
    %144 = vmatprep.subr.mxu0 0.0
    %145 = vmatpush1.xpose.msra.mxu0 0.0
    %146 = vmatprep.subr.mxu0 0.0
    %147 = vmatpush1.xpose.msra.mxu0 0.0
    %148 = vmatprep.subr.mxu0 0.0
    %149 = vmatpush1.xpose.msra.mxu0 0.0
    %150 = vmatprep.subr.mxu0 0.0
    %151 = vmatpush1.xpose.msra.mxu0 0.0
    %152 = vmatprep.subr.mxu0 0.0
    %153 = vmatpush1.xpose.msra.mxu0 0.0
    %154 = vmatprep.subr.mxu0 0.0
    %155 = vmatpush1.xpose.msra.mxu0 0.0
    %156 = vmatprep.subr.mxu0 0.0
    %157 = vmatpush1.xpose.msra.mxu0 0.0
    %158 = vmatprep.subr.mxu0 %v120
    %159 = vmatpush1.xpose.msra.mxu0 %v118
    %160 = vmatprep.subr.mxu0 0.0
    %161 = vmatpush2.xpose.msra.mxu0 0.0
    %162 = vmatprep.subr.mxu0 0.0
    %163 = vmatpush2.xpose.msra.mxu0 0.0
    %164 = vmatprep.subr.mxu0 0.0
    %165 = vmatpush2.xpose.msra.mxu0 0.0
    %166 = vmatprep.subr.mxu0 0.0
    %167 = vmatpush2.xpose.msra.mxu0 0.0
    %168 = vmatprep.subr.mxu0 0.0
    %169 = vmatpush2.xpose.msra.mxu0 0.0
    %170 = vmatprep.subr.mxu0 0.0
    %171 = vmatpush2.xpose.msra.mxu0 0.0
    %172 = vmatprep.subr.mxu0 0.0
    %173 = vmatpush2.xpose.msra.mxu0 0.0
    %174 = vmatprep.subr.mxu0 0.0
    %175 = vmatpush2.xpose.msra.mxu0 0.0
    %176 = vmatprep.subr.mxu0 0.0
    %177 = vmatpush2.xpose.msra.mxu0 0.0
    %178 = vmatprep.subr.mxu0 0.0
    %179 = vmatpush2.xpose.msra.mxu0 0.0
    %180 = vmatprep.subr.mxu0 0.0
    %181 = vmatpush2.xpose.msra.mxu0 0.0
    %182 = vmatprep.subr.mxu0 0.0
    %183 = vmatpush2.xpose.msra.mxu0 0.0
    %184 = vmatprep.subr.mxu0 0.0
    %185 = vmatpush2.xpose.msra.mxu0 0.0
    %186 = vmatprep.subr.mxu0 0.0
    %187 = vmatpush2.xpose.msra.mxu0 0.0
    %188 = vmatprep.subr.mxu0 0.0
    %189 = vmatpush2.xpose.msra.mxu0 0.0
    %190 = vmatprep.subr.mxu0 0.0
    %191 = vmatpush2.xpose.msra.mxu0 0.0
    %192 = vmatprep.mubr.f32.mxu0 %v120
    %193 = vmatmul.mubr.f32.gmra.mxu0 %v118
    %v194 = vpop.f32.mrf.mxu0
    %v195 = vadd.f32 0.0, %v194
    %v196 = vpop.f32.mrf.mxu0
    %197 = vdwg.mxu0
    %v198 = vadd.f32 %v116, %v195
    %vm199 = vcmask 3072
    %200 = vst.msk [vmem:[%s1] sm:$0xf] %vm199, %v127
    %vm201 = vcmask 27648
    %202 = vst.msk [vmem:[#allocation5] sm:$0xf] %vm201, %v198
    // Predicated region
    $region14: #{tpu_custom_call.1} parent=1 // pred_check
      _
    $region15: #{tpu_custom_call.1} parent=1 // pred_check_branch
      %204 = sbr.rel (0) target = $region17
    $region16: #{tpu_custom_call.1} parent=1 // pred_region
      _
    $region17: #{tpu_custom_call.1} parent=1 // pred_fallthru
      _
    // Predicated region
    $region18: #{tpu_custom_call.1} parent=1 // pred_check
      _
    $region19: #{tpu_custom_call.1} parent=1 // pred_check_branch
      %206 = sbr.rel (0) target = $region21
    $region20: #{tpu_custom_call.1} parent=1 // pred_region
      %s208 = ssub.s32 64, 64
      %209 = vsyncadd [#allocation4], %s208
      %s211 = sshll.u32 [#allocation5], 4
      %s212 = int_to_ptr.vmem [resolvable:$true] %s211
      %214 = dma.vmem_to_hbm [thread:$0]  %s212, 64, %s2, [#allocation4]
    $region21: #{tpu_custom_call.1} parent=1 // pred_fallthru
      _
    // Predicated region
    $region22: #{tpu_custom_call.1} parent=1 // pred_check
      _
    $region23: #{tpu_custom_call.1} parent=1 // pred_check_branch
      %216 = sbr.rel (0) target = $region25
    $region24: #{tpu_custom_call.1} parent=1 // pred_region
      _
    $region25: #{tpu_custom_call.1} parent=1 // pred_fallthru
      _
    // Predicated region
    $region26: #{tpu_custom_call.1} parent=1 // pred_check
      _
    $region27: #{tpu_custom_call.1} parent=1 // pred_check_branch
      %218 = sbr.rel (0) target = $region29
    $region28: #{tpu_custom_call.1} parent=1 // pred_region
      %219 = dma.done [#allocation4], 64
    $region29: #{tpu_custom_call.1} parent=1 // pred_fallthru
      _
    %220 = vsyncpa [#allocation3], 1
    %221 = vsyncpa [#allocation4], 1

</llo_original>
